<compile_context>
chip_gen: v7x
topology: tpu7x:2x2x1
jax: 0.10.0
libtpu: 0.0.40
codegen_flags: <defaults>
</compile_context>

<pallas_src>
import jax
import jax.numpy as jnp
from jax import lax
from jax.experimental import pallas as pl
from jax.experimental.pallas import tpu as pltpu


def _make_ce_kernel(tile_n: int, n_total: int, scale: float):
    inv_n = float(scale) / float(n_total)

    def kernel(pred_ref, labels_ref, weight_ref, out_ref, acc_ref):
        i = pl.program_id(0)

        @pl.when(i == 0)
        def _init():
            acc_ref[0] = jnp.float32(0.0)

        pred = pred_ref[...].astype(jnp.float32)      # (tile_n, C) f32
        labels = labels_ref[...]                      # (tile_n, 1) i32
        w_row = weight_ref[...].astype(jnp.float32)   # (1, C)      f32

        # true-class mask via 2-D iota (no f32 one-hot materialized)
        class_ids = lax.broadcasted_iota(jnp.int32, pred.shape, 1)
        match = class_ids == labels                   # (tile_n, C) bool

        # numerically-stable log-softmax, gathered only at the true class
        m = jnp.max(pred, axis=1, keepdims=True)                        # (tile_n, 1)
        shifted = pred - m
        sum_e = jnp.sum(jnp.exp(shifted), axis=1, keepdims=True)        # (tile_n, 1)
        shifted_y = jnp.sum(jnp.where(match, shifted, 0.0),
                            axis=1, keepdims=True)                      # (tile_n, 1)
        logsm_y = shifted_y - jnp.log(sum_e)                            # (tile_n, 1)

        # per-sample class weight via select-gather
        w_i = jnp.sum(jnp.where(match, w_row, 0.0), axis=1, keepdims=True)

        ce_row = -w_i * logsm_y                                         # (tile_n, 1)

        # mask rows past N on the last (partial) tile
        row_ids = i * tile_n + lax.broadcasted_iota(jnp.int32, ce_row.shape, 0)
        ce_row = jnp.where(row_ids < n_total, ce_row, 0.0)

        acc_ref[0] = acc_ref[0] + jnp.sum(ce_row)

        @pl.when(i == pl.num_programs(0) - 1)
        def _finalize():
            out_ref[0, 0] = acc_ref[0] * inv_n

    return kernel


def custom_cross_entropy(pred, labels, class_weight, scale: float = 1.0,
                         tile_n: int | None = None):
    """pred: (N, C) float, labels: (N,) int, class_weight: (C,) float -> scalar f32."""
    n, c = pred.shape

    labels2d = labels.astype(jnp.int32).reshape(n, 1)
    weight2d = class_weight.astype(jnp.float32).reshape(1, c)

    bytes_per_row = c * jnp.dtype(pred.dtype).itemsize
    if tile_n is None:
        # ~4 MiB per pred tile (double-buffered -> 8 MiB), row cap keeps very
        # small-C cases from producing absurdly tall tiles.
        tile_n = max(8, min(4096, (4 << 20) // max(1, bytes_per_row)))
    if tile_n >= n:
        tile_n = n                            # single full-extent block (always legal)
    else:
        tile_n = max(8, (tile_n // 8) * 8)    # sublane-aligned block
    grid = pl.cdiv(n, tile_n)

    out = pl.pallas_call(
        _make_ce_kernel(tile_n, n, float(scale)),
        out_shape=jax.ShapeDtypeStruct((1, 1), jnp.float32),
        grid_spec=pltpu.PrefetchScalarGridSpec(
            num_scalar_prefetch=0,
            grid=(grid,),
            in_specs=[
                pl.BlockSpec((tile_n, c), lambda i: (i, 0)),   # pred stream
                pl.BlockSpec((tile_n, 1), lambda i: (i, 0)),   # labels stream
                pl.BlockSpec((1, c), lambda i: (0, 0)),        # weights (resident)
            ],
            out_specs=pl.BlockSpec(memory_space=pltpu.MemorySpace.SMEM),
            scratch_shapes=[pltpu.SMEM((1,), jnp.float32)],
        ),
        compiler_params=pltpu.CompilerParams(
            dimension_semantics=("arbitrary",),
            vmem_limit_bytes=32 << 20,
        ),
    )(pred, labels2d, weight2d)
    return out[0, 0]


def _reference(pred, labels, class_weight, scale):
    # pure-JAX reference of the PyTorch forward (for sanity checking)
    n, c = pred.shape
    log_sm = jax.nn.log_softmax(pred.astype(jnp.float32), axis=1)
    one_hot = jax.nn.one_hot(labels, c, dtype=jnp.float32)
    w_i = class_weight.astype(jnp.float32)[labels]               # (N,)
    ce = -jnp.sum(w_i[:, None] * one_hot * log_sm, axis=1)       # (N,)
    return scale * jnp.mean(ce)


if __name__ == "__main__":
    key = jax.random.PRNGKey(0)

    # Case 1: small shapes consistent with the module (batch=8, num_classes=16)
    N, C = 8, 16
    scale = 2.0
    k1, k2 = jax.random.split(key)
    pred = jax.random.normal(k1, (N, C), dtype=jnp.float32)
    labels = jax.random.randint(k2, (N,), 0, C, dtype=jnp.int32)
    class_weight = jnp.linspace(0.5, 1.5, C, dtype=jnp.float32)

    out = jax.block_until_ready(custom_cross_entropy(pred, labels, class_weight, scale))
    ref = _reference(pred, labels, class_weight, scale)
    assert jnp.allclose(out, ref, rtol=1e-5, atol=1e-5), (out, ref)

    # Case 2: exercises a multi-tile grid, a partial last tile, and a class
    # count that is not a multiple of the 128-lane width (no HBM padding used).
    N2, C2 = 200, 130
    k3, k4 = jax.random.split(k1)
    pred2 = jax.random.normal(k3, (N2, C2), dtype=jnp.float32)
    labels2 = jax.random.randint(k4, (N2,), 0, C2, dtype=jnp.int32)
    class_weight2 = jnp.linspace(0.25, 2.0, C2, dtype=jnp.float32)

    out2 = jax.block_until_ready(
        custom_cross_entropy(pred2, labels2, class_weight2, scale=0.5, tile_n=64))
    ref2 = _reference(pred2, labels2, class_weight2, 0.5)
    assert jnp.allclose(out2, ref2, rtol=1e-5, atol=1e-5), (out2, ref2)

    print("KERNEL_OK")
</pallas_src>

<mosaic_0001>
module attributes {stable_mosaic.version = 11 : i64} {
  func.func @kernel(%arg0: i32, %arg1: memref<8x16xf32, #tpu.memory_space<vmem>>, %arg2: memref<8x1xi32, #tpu.memory_space<vmem>>, %arg3: memref<1x16xf32, #tpu.memory_space<vmem>>, %arg4: memref<1x1xf32, #tpu.memory_space<smem>>, %arg5: memref<1xf32, #tpu.memory_space<smem>>) attributes {dimension_semantics = [#tpu.dimension_semantics<arbitrary>], iteration_bounds = array<i64: 1>, scalar_prefetch = 0 : i64, scratch_operands = 1 : i64, tpu.core_type = #tpu.core_type<tc>, window_params = [{transform_indices = @transform_0, window_bounds = array<i64: 8, 16>}, {transform_indices = @transform_1, window_bounds = array<i64: 8, 1>}, {pipeline_mode = #tpu.pipeline_mode<synchronous>, transform_indices = @transform_2, window_bounds = array<i64: 1, 16>}, {transform_indices = @transform_3, window_bounds = array<i64: 1, 1>}]} {
    %c0_i32 = arith.constant 0 : i32
    %0 = arith.cmpi eq, %arg0, %c0_i32 : i32
    %1 = arith.extui %0 : i1 to i32
    %c0_i32_0 = arith.constant 0 : i32
    %2 = arith.cmpi ne, %1, %c0_i32_0 : i32
    scf.if %2 {
      %cst_19 = arith.constant 0.000000e+00 : f32
      %c0_20 = arith.constant 0 : index
      %49 = memref.load %arg5[%c0_20] : memref<1xf32, #tpu.memory_space<smem>>
      memref.store %cst_19, %arg5[%c0_20] : memref<1xf32, #tpu.memory_space<smem>>
    } else {
    }
    %c0 = arith.constant 0 : index
    %c0_1 = arith.constant 0 : index
    %3 = vector.load %arg1[%c0, %c0_1] : memref<8x16xf32, #tpu.memory_space<vmem>>, vector<8x16xf32>
    %c0_2 = arith.constant 0 : index
    %c0_3 = arith.constant 0 : index
    %4 = vector.load %arg2[%c0_2, %c0_3] : memref<8x1xi32, #tpu.memory_space<vmem>>, vector<8x1xi32>
    %c0_4 = arith.constant 0 : index
    %c0_5 = arith.constant 0 : index
    %5 = vector.load %arg3[%c0_4, %c0_5] : memref<1x16xf32, #tpu.memory_space<vmem>>, vector<1x16xf32>
    %6 = tpu.iota {dimensions = array<i32: 1>} : vector<8x16xi32>
    %7 = vector.broadcast %4 : vector<8x1xi32> to vector<8x16xi32>
    %8 = arith.cmpi eq, %6, %7 : vector<8x16xi32>
    %cst = arith.constant dense<0xFF800000> : vector<8xf32>
    %9 = vector.multi_reduction <maximumf>, %3, %cst [1] : vector<8x16xf32> to vector<8xf32>
    %10 = vector.shape_cast %9 : vector<8xf32> to vector<8x1xf32>
    %11 = vector.broadcast %10 : vector<8x1xf32> to vector<8x16xf32>
    %12 = arith.subf %3, %11 : vector<8x16xf32>
    %13 = math.exp %12 : vector<8x16xf32>
    %cst_6 = arith.constant dense<0.000000e+00> : vector<8xf32>
    %14 = vector.multi_reduction <add>, %13, %cst_6 [1] : vector<8x16xf32> to vector<8xf32>
    %15 = vector.shape_cast %14 : vector<8xf32> to vector<8x1xf32>
    %cst_7 = arith.constant 0.000000e+00 : f32
    %16 = vector.broadcast %cst_7 : f32 to vector<8x16xf32>
    %17 = arith.select %8, %12, %16 : vector<8x16xi1>, vector<8x16xf32>
    %cst_8 = arith.constant dense<0.000000e+00> : vector<8xf32>
    %18 = vector.multi_reduction <add>, %17, %cst_8 [1] : vector<8x16xf32> to vector<8xf32>
    %19 = vector.shape_cast %18 : vector<8xf32> to vector<8x1xf32>
    %20 = math.log %15 : vector<8x1xf32>
    %21 = arith.subf %19, %20 : vector<8x1xf32>
    %cst_9 = arith.constant 0.000000e+00 : f32
    %22 = vector.shape_cast %5 : vector<1x16xf32> to vector<1x16xf32>
    %23 = vector.broadcast %22 : vector<1x16xf32> to vector<8x16xf32>
    %24 = vector.broadcast %cst_9 : f32 to vector<8x16xf32>
    %25 = arith.select %8, %23, %24 : vector<8x16xi1>, vector<8x16xf32>
    %cst_10 = arith.constant dense<0.000000e+00> : vector<8xf32>
    %26 = vector.multi_reduction <add>, %25, %cst_10 [1] : vector<8x16xf32> to vector<8xf32>
    %27 = vector.shape_cast %26 : vector<8xf32> to vector<8x1xf32>
    %cst_11 = arith.constant 0.000000e+00 : f32
    %28 = vector.broadcast %cst_11 : f32 to vector<8x1xf32>
    %29 = arith.subf %28, %27 : vector<8x1xf32>
    %30 = arith.mulf %29, %21 : vector<8x1xf32>
    %c8_i32 = arith.constant 8 : i32
    %31 = arith.muli %arg0, %c8_i32 : i32
    %32 = tpu.iota {dimensions = array<i32: 0>} : vector<8x1xi32>
    %33 = vector.broadcast %31 : i32 to vector<8x1xi32>
    %34 = arith.addi %33, %32 : vector<8x1xi32>
    %c8_i32_12 = arith.constant 8 : i32
    %35 = vector.broadcast %c8_i32_12 : i32 to vector<8x1xi32>
    %36 = arith.cmpi slt, %34, %35 : vector<8x1xi32>
    %cst_13 = arith.constant 0.000000e+00 : f32
    %37 = vector.broadcast %cst_13 : f32 to vector<8x1xf32>
    %38 = arith.select %36, %30, %37 : vector<8x1xi1>, vector<8x1xf32>
    %c0_14 = arith.constant 0 : index
    %39 = memref.load %arg5[%c0_14] : memref<1xf32, #tpu.memory_space<smem>>
    %40 = vector.shape_cast %38 : vector<8x1xf32> to vector<1x8x1xf32>
    %cst_15 = arith.constant dense<0.000000e+00> : vector<1xf32>
    %41 = vector.multi_reduction <add>, %40, %cst_15 [1, 2] : vector<1x8x1xf32> to vector<1xf32>
    %42 = vector.shape_cast %41 : vector<1xf32> to vector<1x1x1xf32>
    %43 = vector.extract %42[0, 0, 0] : f32 from vector<1x1x1xf32>
    %44 = arith.addf %39, %43 : f32
    %c0_16 = arith.constant 0 : index
    %45 = memref.load %arg5[%c0_16] : memref<1xf32, #tpu.memory_space<smem>>
    memref.store %44, %arg5[%c0_16] : memref<1xf32, #tpu.memory_space<smem>>
    %c0_i32_17 = arith.constant 0 : i32
    %46 = arith.cmpi eq, %arg0, %c0_i32_17 : i32
    %47 = arith.extui %46 : i1 to i32
    %c0_i32_18 = arith.constant 0 : i32
    %48 = arith.cmpi ne, %47, %c0_i32_18 : i32
    scf.if %48 {
      %c0_19 = arith.constant 0 : index
      %49 = memref.load %arg5[%c0_19] : memref<1xf32, #tpu.memory_space<smem>>
      %cst_20 = arith.constant 2.500000e-01 : f32
      %50 = arith.mulf %49, %cst_20 : f32
      %c0_21 = arith.constant 0 : index
      %c0_22 = arith.constant 0 : index
      %51 = memref.load %arg4[%c0_21, %c0_22] : memref<1x1xf32, #tpu.memory_space<smem>>
      memref.store %50, %arg4[%c0_21, %c0_22] : memref<1x1xf32, #tpu.memory_space<smem>>
    } else {
    }
    return
  }
  func.func @transform_0(%arg0: i32) -> (i32, i32) {
    %c0_i32 = arith.constant 0 : i32
    %c0_i32_0 = arith.constant 0 : i32
    return %arg0, %c0_i32 : i32, i32
  }
  func.func @transform_1(%arg0: i32) -> (i32, i32) {
    %c0_i32 = arith.constant 0 : i32
    %c0_i32_0 = arith.constant 0 : i32
    return %arg0, %c0_i32 : i32, i32
  }
  func.func @transform_2(%arg0: i32) -> (i32, i32) {
    %c0_i32 = arith.constant 0 : i32
    %c0_i32_0 = arith.constant 0 : i32
    %c0_i32_1 = arith.constant 0 : i32
    return %c0_i32, %c0_i32_0 : i32, i32
  }
  func.func @transform_3(%arg0: i32) -> (i32, i32) {
    %c0_i32 = arith.constant 0 : i32
    %c0_i32_0 = arith.constant 0 : i32
    %c0_i32_1 = arith.constant 0 : i32
    return %c0_i32, %c0_i32_0 : i32, i32
  }
}

</mosaic_0001>

<llo_original>
// kernel: tpu_custom_call.1
$region0: #{tpu_custom_call.1}
  #allocation0 [shape = 'u32[]', space=smem, size = 0x4, offset = 0x4, fixed_abs, tag = 'smem constant byte address 0x4 - core index']
  #allocation1 [shape = 'u32[144,128]{1,0:T(1,128)}', space=vmem, size = 0x12000, scoped, tag = 'internal scratch']
  #allocation2 [shape = 'f32[1]{0:T(128)}', space=smem, size = 0x200, scoped, tag = 'scratch operand']
  %s0 = inlined_call_operand.vmem [shape: f32[8,16], index: 0, kind: input, shape index: {}]
  %s1 = inlined_call_operand.vmem [shape: s32[8,1], index: 1, kind: input, shape index: {}]
  %s2 = inlined_call_operand.vmem [shape: f32[1,16], index: 2, kind: input, shape index: {}]
  %s3 = inlined_call_operand.hbm [shape: f32[1,1], index: 3, kind: output, shape index: {}]
  %s4 = sld [smem:[#allocation0]]
  $region30: #{tpu_custom_call.1} parent=0
    _
  %s6 = ssub.s32 1, %s4
  %s7 = scalar_select 0, %s6, %s4
  $region1: #{tpu_custom_call.1} parent=0
    #allocation3 [shape = 'u8[512]{0}', space=smem, size = 0x200, scoped, tag = 'output window, operand 0, single buffered']
    #allocation4 [shape = 's32[1]{0}', space=sflag, size = 0x4, scoped, tag = 'scoped memory for tpu_custom_call.1']
    %8 = vsyncpa [#allocation4], 0
    // Predicated region
    $region2: #{tpu_custom_call.1} parent=1 // pred_check
      _
    $region3: #{tpu_custom_call.1} parent=1 // pred_check_branch
      %10 = sbr.rel (0) target = $region5
    $region4: #{tpu_custom_call.1} parent=1 // pred_region
      _
    $region5: #{tpu_custom_call.1} parent=1 // pred_fallthru
      _
    // Predicated region
    $region6: #{tpu_custom_call.1} parent=1 // pred_check
      _
    $region7: #{tpu_custom_call.1} parent=1 // pred_check_branch
      %12 = sbr.rel (0) target = $region9
    $region8: #{tpu_custom_call.1} parent=1 // pred_region
      _
    $region9: #{tpu_custom_call.1} parent=1 // pred_fallthru
      _
    // Predicated region
    $region10: #{tpu_custom_call.1} parent=1 // pred_check
      _
    $region11: #{tpu_custom_call.1} parent=1 // pred_check_branch
      %14 = sbr.rel (0) target = $region13
    $region12: #{tpu_custom_call.1} parent=1 // pred_region
      _
    $region13: #{tpu_custom_call.1} parent=1 // pred_fallthru
      _
    %p15 = scmp.eq.s32.totalorder 0, 0
    // Predicated region
    $region14: #{tpu_custom_call.1} parent=1 // pred_check
      %p16 = pneg %p15
    $region15: #{tpu_custom_call.1} parent=1 // pred_check_branch
      %18 = sbr.rel (%p16) target = $region17
    $region16: #{tpu_custom_call.1} parent=1 // pred_region
      %s19 = scalar_lea.smem [#allocation2], 0
      %20 = sst [smem:[%s19]] 0.0
    $region17: #{tpu_custom_call.1} parent=1 // pred_fallthru
      _
    %v21 = vld [vmem:[%s0] sm:$0xff]
    %v22 = vld [vmem:[%s1] sm:$0xff]
    %v23 = vld [vmem:[%s2] sm:$0x1]
    %v24 = vlaneseq
    %v25 = vand.u32 %v24, 127
    %26 = vset.pattern.permute.xlu0 0
    %27 = vperm.xlu0 %26, %v22
    %v28 = vpop.permute.xlu0 %27
    %vm29 = vcmp.eq.s32.totalorder %v25, %v28
    %vm30 = vcmask 130048
    %v31 = vsel %vm30, %v21, -inf
    %32 = vmax.xlane.f32.xlu0 %v31
    %v33 = vpop.xlane.xlu0 %32
    %v34 = vsub.f32 %v21, %v33
    %v35 = vmul.f32 %v34, 1.442695
    %v36 = vpow.pop %v35
    %v37 = vsel %vm30, %v36, 0.0
    %38 = vadd.xlane.f32.xlu0 %v37
    %v39 = vpop.xlane.xlu0 %38
    %v40 = vsel %vm29, %v34, 0.0
    %v41 = vsel %vm30, %v40, 0.0
    %42 = vadd.xlane.f32.xlu0 %v41
    %v43 = vpop.xlane.xlu0 %42
    %v44 = vlog2.pop %v39
    %v45 = vmul.f32 %v44, 0.6931472
    %v46 = vsub.f32 %v43, %v45
    %v48 = vlaneseq
    %v49 = vshrl.u32 %v48, 7
    %v50 = vsub.s32 0, %v49
    %v51 = vrot.slane %v23, %v50
    %v53 = vsel %vm29, %v51, 0.0
    %v54 = vsel %vm30, %v53, 0.0
    %55 = vadd.xlane.f32.xlu0 %v54
    %v56 = vpop.xlane.xlu0 %55
    %v57 = vsub.f32 0.0, %v56
    %v58 = vmul.f32 %v57, %v46
    %s59 = smul.u32 0, 8
    %v60 = vlaneseq
    %v61 = vshrl.u32 %v60, 7
    %v62 = vstv %s59
    %v63 = vadd.s32 %v62, %v61
    %vm64 = vcmp.lt.s32.totalorder %v63, 8
    %v65 = vsel %vm64, %v58, 0.0
    %s66 = sld [smem:[#allocation2]]
    %vm67 = vcmask 7168
    %v68 = vsel %vm67, %v65, 0.0
    %69 = vadd.xlane.f32.xlu0 %v68
    %v70 = vpop.xlane.xlu0 %69
    %v71 = vrot.slane %v70, 4
    %v72 = vadd.f32 %v70, %v71
    %v73 = vrot.slane %v72, 2
    %v74 = vadd.f32 %v72, %v73
    %v75 = vrot.slane %v74, 1
    %v76 = vadd.f32 %v74, %v75
    %s77 = vtos %v76
    %s78 = sadd.f32 %s66, %s77
    %s79 = scalar_lea.smem [#allocation2], 0
    %80 = sst [smem:[%s79]] %s78
    // Predicated region
    $region18: #{tpu_custom_call.1} parent=1 // pred_check
      %p81 = pneg %p15
    $region19: #{tpu_custom_call.1} parent=1 // pred_check_branch
      %83 = sbr.rel (%p81) target = $region21
    $region20: #{tpu_custom_call.1} parent=1 // pred_region
      %s84 = sld [smem:[#allocation2]]
      %s85 = smul.f32 %s84, 0.25
      %s86 = scalar_lea.smem [#allocation3], 0
      %87 = sst [smem:[%s86]] %s85
    $region21: #{tpu_custom_call.1} parent=1 // pred_fallthru
      _
    // Predicated region
    $region22: #{tpu_custom_call.1} parent=1 // pred_check
      _
    $region23: #{tpu_custom_call.1} parent=1 // pred_check_branch
      %89 = sbr.rel (0) target = $region25
    $region24: #{tpu_custom_call.1} parent=1 // pred_region
      %s91 = ssub.s32 16, 16
      %92 = vsyncadd [#allocation4], %s91
      %95 = dma.smem_to_hbm [#allocation3], 16, %s3, [#allocation4]
    $region25: #{tpu_custom_call.1} parent=1 // pred_fallthru
      _
    // Predicated region
    $region26: #{tpu_custom_call.1} parent=1 // pred_check
      _
    $region27: #{tpu_custom_call.1} parent=1 // pred_check_branch
      %97 = sbr.rel (0) target = $region29
    $region28: #{tpu_custom_call.1} parent=1 // pred_region
      %98 = dma.done [#allocation4], 16
    $region29: #{tpu_custom_call.1} parent=1 // pred_fallthru
      _
    %99 = sfence
    %100 = vsyncpa [#allocation4], 1

</llo_original>
